<compile_context>
chip_gen: v5e
topology: v5e:2x2
jax: 0.10.0
libtpu: 0.0.40
codegen_flags: <defaults>
</compile_context>

<pallas_src>
import functools

import jax
import jax.numpy as jnp
from jax.experimental import pallas as pl
from jax.experimental.pallas import tpu as pltpu

_TARGET_BLOCK_BYTES = 4 * 1024 * 1024  # ~4 MiB of scores per grid step


def _multi_task_loss_kernel(targets_ref, scores_ref, preds_ref, out_ref,
                            *, n_valid, tile_n, nbh):
    core = pl.program_id(0)
    i = pl.program_id(1)

    @pl.when(i == 0)
    def _():
        out_ref[...] = jnp.zeros_like(out_ref)

    s = scores_ref[...].astype(jnp.float32)          # (tile_n, C)
    t = targets_ref[...]                             # (tile_n, 1) int32
    tn, ncls = s.shape

    # ---- CrossEntropy per row: stable log-sum-exp minus target logit ----
    m = jnp.max(s, axis=-1, keepdims=True)
    z = s - m
    lse = jnp.log(jnp.sum(jnp.exp(z), axis=-1, keepdims=True))               # (tn,1)
    col = jax.lax.broadcasted_iota(jnp.int32, (tn, ncls), 1)
    logit_t = jnp.sum(jnp.where(col == t, z, 0.0), axis=-1, keepdims=True)   # (tn,1)

    # ---- SmoothL1 (beta=1) on column indicator(t) in {0,1}: static column select ----
    fg = t != 0
    a = jnp.where(fg, s[:, 1:2], s[:, 0:1])
    b = jnp.where(fg, preds_ref[:, 1:2].astype(jnp.float32),
                      preds_ref[:, 0:1].astype(jnp.float32))
    d = a - b
    ad = jnp.abs(d)
    sl1 = jnp.where(ad < 1.0, 0.5 * d * d, ad - 0.5)                         # (tn,1)

    per_row = (lse - logit_t) + sl1                                          # (tn,1)

    # Logical (unclamped) block index for this grid step. Blocks past the end of
    # the data (ragged tail, or duplicates created by the clamped index_map when
    # the core split does not divide evenly) are zeroed before the reduction.
    gidx = core * nbh + i
    block_start = gidx * tile_n

    @pl.when(block_start + tile_n <= n_valid)
    def _():  # fully-valid block: unmasked reduction on the common path
        out_ref[...] += jnp.sum(per_row, axis=0, keepdims=True).reshape(1, 1, 1)

    @pl.when(block_start + tile_n > n_valid)
    def _():  # ragged / duplicate block: mask with a select (never a multiply)
        row = jax.lax.broadcasted_iota(jnp.int32, (tn, 1), 0) + block_start
        masked = jnp.where(row < n_valid, per_row, 0.0)
        out_ref[...] += jnp.sum(masked, axis=0, keepdims=True).reshape(1, 1, 1)


def multi_task_loss(scores, preds, targets, lam=1, block_n=None, num_cores=2):
    """scores: (N, C), preds: (N, C), targets: (N,) int. Returns scalar f32 loss.

    `lam` is stored by the PyTorch module but never used in forward; ignored.
    `block_n` optionally caps the row tile (default: byte-sized auto tile).
    """
    del lam
    N, C = scores.shape
    t2 = targets.reshape(N, 1).astype(jnp.int32)

    # Byte-based tile sizing: ~4 MiB of (lane-padded) scores per grid step,
    # capped at 2048 rows to bound the (tile_n, 1) vreg-chain pressure.
    lane_c = ((C + 127) // 128) * 128
    auto_tile = (_TARGET_BLOCK_BYTES // (4 * lane_c)) // 8 * 8
    auto_tile = int(max(8, min(2048, auto_tile)))
    cap = auto_tile if block_n is None else int(block_n)
    if N <= cap:
        tile_n = N                      # single full-extent block (always legal)
    else:
        tile_n = max(8, (cap // 8) * 8)  # multiple of 8 sublanes
    nb = pl.cdiv(N, tile_n)              # number of row blocks
    nbh = pl.cdiv(nb, num_cores)         # row blocks per core row

    # preds: only columns {0,1} are ever read; move just the first <=128 lanes.
    pc = C if C < 128 else 128

    def row_block(c, i):
        # Clamp so trailing steps on the last core re-read the last valid block;
        # their contribution is zeroed in-kernel via the logical row mask.
        return jnp.minimum(c * nbh + i, nb - 1)

    kernel = functools.partial(
        _multi_task_loss_kernel, n_valid=N, tile_n=tile_n, nbh=nbh)

    out = pl.pallas_call(
        kernel,
        out_shape=jax.ShapeDtypeStruct((num_cores, 1, 1), jnp.float32),
        grid_spec=pltpu.PrefetchScalarGridSpec(
            num_scalar_prefetch=0,
            grid=(num_cores, nbh),
            in_specs=[
                pl.BlockSpec((tile_n, 1), lambda c, i: (row_block(c, i), 0)),   # targets
                pl.BlockSpec((tile_n, C), lambda c, i: (row_block(c, i), 0)),   # scores
                pl.BlockSpec((tile_n, pc), lambda c, i: (row_block(c, i), 0)),  # preds[:, :pc]
            ],
            out_specs=pl.BlockSpec((1, 1, 1), lambda c, i: (c, 0, 0)),          # per-core acc
        ),
        compiler_params=pltpu.CompilerParams(
            dimension_semantics=("parallel", "arbitrary"),
            vmem_limit_bytes=48 * 1024 * 1024),
    )(t2, scores, preds)

    # Cross-core reduction and the single 1/N scale happen in the wrapper.
    return jnp.sum(out) * jnp.float32(1.0 / N)


if __name__ == "__main__":
    key = jax.random.PRNGKey(0)
    k1, k2, k3 = jax.random.split(key, 3)

    # 20 RoIs, 16 classes.
    N, C = 20, 16
    scores = jax.random.normal(k1, (N, C), jnp.float32)
    preds = jax.random.normal(k2, (N, C), jnp.float32)
    targets = jax.random.randint(k3, (N,), 0, C, jnp.int32)

    # pure-JAX reference
    logp = jax.nn.log_softmax(scores, axis=-1)
    ce_ref = -jnp.mean(logp[jnp.arange(N), targets])
    ind = (targets != 0).astype(jnp.int32)
    a = scores[jnp.arange(N), ind]
    b = preds[jnp.arange(N), ind]
    d = a - b
    sl1 = jnp.where(jnp.abs(d) < 1.0, 0.5 * d * d, jnp.abs(d) - 0.5)
    ref = ce_ref + jnp.mean(sl1)

    # Small tile: exercises multi-block accumulation, the ragged-tail mask and the
    # clamped duplicate block on the second core row.
    loss_small = multi_task_loss(scores, preds, targets, block_n=8)
    # Auto tile: single full block on core row 0; core row 1 is a masked duplicate.
    loss_auto = multi_task_loss(scores, preds, targets)
    jax.block_until_ready((loss_small, loss_auto))

    assert jnp.allclose(loss_small, ref, rtol=1e-5, atol=1e-5), (loss_small, ref)
    assert jnp.allclose(loss_auto, ref, rtol=1e-5, atol=1e-5), (loss_auto, ref)
    print("KERNEL_OK")
</pallas_src>

<mosaic_0001>
module attributes {stable_mosaic.version = 11 : i64} {
  func.func @_multi_task_loss_kernel(%arg0: i32, %arg1: i32, %arg2: memref<8x1xi32, #tpu.memory_space<vmem>>, %arg3: memref<8x16xf32, #tpu.memory_space<vmem>>, %arg4: memref<8x16xf32, #tpu.memory_space<vmem>>, %arg5: memref<1x1x1xf32, #tpu.memory_space<vmem>>) attributes {dimension_semantics = [#tpu.dimension_semantics<parallel>, #tpu.dimension_semantics<arbitrary>], iteration_bounds = array<i64: 2, 2>, scalar_prefetch = 0 : i64, scratch_operands = 0 : i64, tpu.core_type = #tpu.core_type<tc>, window_params = [{transform_indices = @transform_0, window_bounds = array<i64: 8, 1>}, {transform_indices = @transform_1, window_bounds = array<i64: 8, 16>}, {transform_indices = @transform_2, window_bounds = array<i64: 8, 16>}, {transform_indices = @transform_3, window_bounds = array<i64: 1, 1, 1>}]} {
    %c0_i32 = arith.constant 0 : i32
    %0 = arith.cmpi eq, %arg1, %c0_i32 : i32
    %1 = arith.extui %0 : i1 to i32
    %c0_i32_0 = arith.constant 0 : i32
    %2 = arith.cmpi ne, %1, %c0_i32_0 : i32
    scf.if %2 {
      %cst_19 = arith.constant 0.000000e+00 : f32
      %51 = vector.broadcast %cst_19 : f32 to vector<1x1x1xf32>
      %c0_20 = arith.constant 0 : index
      %c0_21 = arith.constant 0 : index
      %c0_22 = arith.constant 0 : index
      %52 = vector.load %arg5[%c0_20, %c0_21, %c0_22] : memref<1x1x1xf32, #tpu.memory_space<vmem>>, vector<1x1x1xf32>
      tpu.vector_store %arg5[%c0_20, %c0_21, %c0_22], %51 {strides = array<i32>} : memref<1x1x1xf32, #tpu.memory_space<vmem>>, vector<1x1x1xf32>,
    } else {
    }
    %c0 = arith.constant 0 : index
    %c0_1 = arith.constant 0 : index
    %3 = vector.load %arg3[%c0, %c0_1] : memref<8x16xf32, #tpu.memory_space<vmem>>, vector<8x16xf32>
    %c0_2 = arith.constant 0 : index
    %c0_3 = arith.constant 0 : index
    %4 = vector.load %arg2[%c0_2, %c0_3] : memref<8x1xi32, #tpu.memory_space<vmem>>, vector<8x1xi32>
    %cst = arith.constant dense<0xFF800000> : vector<8xf32>
    %5 = vector.multi_reduction <maximumf>, %3, %cst [1] : vector<8x16xf32> to vector<8xf32>
    %6 = vector.shape_cast %5 : vector<8xf32> to vector<8x1xf32>
    %7 = vector.broadcast %6 : vector<8x1xf32> to vector<8x16xf32>
    %8 = arith.subf %3, %7 : vector<8x16xf32>
    %9 = math.exp %8 : vector<8x16xf32>
    %cst_4 = arith.constant dense<0.000000e+00> : vector<8xf32>
    %10 = vector.multi_reduction <add>, %9, %cst_4 [1] : vector<8x16xf32> to vector<8xf32>
    %11 = vector.shape_cast %10 : vector<8xf32> to vector<8x1xf32>
    %12 = math.log %11 : vector<8x1xf32>
    %13 = tpu.iota {dimensions = array<i32: 1>} : vector<8x16xi32>
    %14 = vector.broadcast %4 : vector<8x1xi32> to vector<8x16xi32>
    %15 = arith.cmpi eq, %13, %14 : vector<8x16xi32>
    %cst_5 = arith.constant 0.000000e+00 : f32
    %16 = vector.broadcast %cst_5 : f32 to vector<8x16xf32>
    %17 = arith.select %15, %8, %16 : vector<8x16xi1>, vector<8x16xf32>
    %cst_6 = arith.constant dense<0.000000e+00> : vector<8xf32>
    %18 = vector.multi_reduction <add>, %17, %cst_6 [1] : vector<8x16xf32> to vector<8xf32>
    %19 = vector.shape_cast %18 : vector<8xf32> to vector<8x1xf32>
    %c0_i32_7 = arith.constant 0 : i32
    %20 = vector.broadcast %c0_i32_7 : i32 to vector<8x1xi32>
    %21 = arith.cmpi ne, %4, %20 : vector<8x1xi32>
    %22 = vector.extract_strided_slice %3 {offsets = [0, 1], sizes = [8, 1], strides = [1, 1]} : vector<8x16xf32> to vector<8x1xf32>
    %23 = vector.extract_strided_slice %3 {offsets = [0, 0], sizes = [8, 1], strides = [1, 1]} : vector<8x16xf32> to vector<8x1xf32>
    %24 = arith.select %21, %22, %23 : vector<8x1xi1>, vector<8x1xf32>
    %c0_8 = arith.constant 0 : index
    %c1 = arith.constant 1 : index
    %25 = vector.load %arg4[%c0_8, %c1] : memref<8x16xf32, #tpu.memory_space<vmem>>, vector<8x1xf32>
    %c0_9 = arith.constant 0 : index
    %c0_10 = arith.constant 0 : index
    %26 = vector.load %arg4[%c0_9, %c0_10] : memref<8x16xf32, #tpu.memory_space<vmem>>, vector<8x1xf32>
    %27 = arith.select %21, %25, %26 : vector<8x1xi1>, vector<8x1xf32>
    %28 = arith.subf %24, %27 : vector<8x1xf32>
    %29 = math.absf %28 : vector<8x1xf32>
    %cst_11 = arith.constant 1.000000e+00 : f32
    %30 = vector.broadcast %cst_11 : f32 to vector<8x1xf32>
    %31 = arith.cmpf olt, %29, %30 : vector<8x1xf32>
    %cst_12 = arith.constant 5.000000e-01 : f32
    %32 = vector.broadcast %cst_12 : f32 to vector<8x1xf32>
    %33 = arith.mulf %32, %28 : vector<8x1xf32>
    %34 = arith.mulf %33, %28 : vector<8x1xf32>
    %cst_13 = arith.constant 5.000000e-01 : f32
    %35 = vector.broadcast %cst_13 : f32 to vector<8x1xf32>
    %36 = arith.subf %29, %35 : vector<8x1xf32>
    %37 = arith.select %31, %34, %36 : vector<8x1xi1>, vector<8x1xf32>
    %38 = arith.subf %12, %19 : vector<8x1xf32>
    %39 = arith.addf %38, %37 : vector<8x1xf32>
    %c2_i32 = arith.constant 2 : i32
    %40 = arith.muli %arg0, %c2_i32 : i32
    %41 = arith.addi %40, %arg1 : i32
    %c8_i32 = arith.constant 8 : i32
    %42 = arith.muli %41, %c8_i32 : i32
    %c8_i32_14 = arith.constant 8 : i32
    %43 = arith.addi %42, %c8_i32_14 : i32
    %c20_i32 = arith.constant 20 : i32
    %44 = arith.cmpi sle, %43, %c20_i32 : i32
    %45 = arith.extui %44 : i1 to i32
    %c0_i32_15 = arith.constant 0 : i32
    %46 = arith.cmpi ne, %45, %c0_i32_15 : i32
    scf.if %46 {
      %c0_19 = arith.constant 0 : index
      %c0_20 = arith.constant 0 : index
      %c0_21 = arith.constant 0 : index
      %51 = vector.load %arg5[%c0_19, %c0_20, %c0_21] : memref<1x1x1xf32, #tpu.memory_space<vmem>>, vector<1x1x1xf32>
      %cst_22 = arith.constant dense<0.000000e+00> : vector<1xf32>
      %52 = vector.multi_reduction <add>, %39, %cst_22 [0] : vector<8x1xf32> to vector<1xf32>
      %53 = vector.shape_cast %52 : vector<1xf32> to vector<1x1xf32>
      %54 = vector.shape_cast %53 : vector<1x1xf32> to vector<1x1x1xf32>
      %55 = arith.addf %51, %54 : vector<1x1x1xf32>
      %c0_23 = arith.constant 0 : index
      %c0_24 = arith.constant 0 : index
      %c0_25 = arith.constant 0 : index
      %56 = vector.load %arg5[%c0_23, %c0_24, %c0_25] : memref<1x1x1xf32, #tpu.memory_space<vmem>>, vector<1x1x1xf32>
      tpu.vector_store %arg5[%c0_23, %c0_24, %c0_25], %55 {strides = array<i32>} : memref<1x1x1xf32, #tpu.memory_space<vmem>>, vector<1x1x1xf32>,
    } else {
    }
    %c8_i32_16 = arith.constant 8 : i32
    %47 = arith.addi %42, %c8_i32_16 : i32
    %c20_i32_17 = arith.constant 20 : i32
    %48 = arith.cmpi sgt, %47, %c20_i32_17 : i32
    %49 = arith.extui %48 : i1 to i32
    %c0_i32_18 = arith.constant 0 : i32
    %50 = arith.cmpi ne, %49, %c0_i32_18 : i32
    scf.if %50 {
      %51 = tpu.iota {dimensions = array<i32: 0>} : vector<8x1xi32>
      %52 = vector.broadcast %42 : i32 to vector<8x1xi32>
      %53 = arith.addi %51, %52 : vector<8x1xi32>
      %c20_i32_19 = arith.constant 20 : i32
      %54 = vector.broadcast %c20_i32_19 : i32 to vector<8x1xi32>
      %55 = arith.cmpi slt, %53, %54 : vector<8x1xi32>
      %cst_20 = arith.constant 0.000000e+00 : f32
      %56 = vector.broadcast %cst_20 : f32 to vector<8x1xf32>
      %57 = arith.select %55, %39, %56 : vector<8x1xi1>, vector<8x1xf32>
      %c0_21 = arith.constant 0 : index
      %c0_22 = arith.constant 0 : index
      %c0_23 = arith.constant 0 : index
      %58 = vector.load %arg5[%c0_21, %c0_22, %c0_23] : memref<1x1x1xf32, #tpu.memory_space<vmem>>, vector<1x1x1xf32>
      %cst_24 = arith.constant dense<0.000000e+00> : vector<1xf32>
      %59 = vector.multi_reduction <add>, %57, %cst_24 [0] : vector<8x1xf32> to vector<1xf32>
      %60 = vector.shape_cast %59 : vector<1xf32> to vector<1x1xf32>
      %61 = vector.shape_cast %60 : vector<1x1xf32> to vector<1x1x1xf32>
      %62 = arith.addf %58, %61 : vector<1x1x1xf32>
      %c0_25 = arith.constant 0 : index
      %c0_26 = arith.constant 0 : index
      %c0_27 = arith.constant 0 : index
      %63 = vector.load %arg5[%c0_25, %c0_26, %c0_27] : memref<1x1x1xf32, #tpu.memory_space<vmem>>, vector<1x1x1xf32>
      tpu.vector_store %arg5[%c0_25, %c0_26, %c0_27], %62 {strides = array<i32>} : memref<1x1x1xf32, #tpu.memory_space<vmem>>, vector<1x1x1xf32>,
    } else {
    }
    return
  }
  func.func @transform_0(%arg0: i32, %arg1: i32) -> (i32, i32) {
    %c2_i32 = arith.constant 2 : i32
    %0 = arith.muli %arg0, %c2_i32 : i32
    %1 = arith.addi %0, %arg1 : i32
    %c2_i32_0 = arith.constant 2 : i32
    %2 = arith.minsi %1, %c2_i32_0 : i32
    %c0_i32 = arith.constant 0 : i32
    %c0_i32_1 = arith.constant 0 : i32
    return %2, %c0_i32 : i32, i32
  }
  func.func @transform_1(%arg0: i32, %arg1: i32) -> (i32, i32) {
    %c2_i32 = arith.constant 2 : i32
    %0 = arith.muli %arg0, %c2_i32 : i32
    %1 = arith.addi %0, %arg1 : i32
    %c2_i32_0 = arith.constant 2 : i32
    %2 = arith.minsi %1, %c2_i32_0 : i32
    %c0_i32 = arith.constant 0 : i32
    %c0_i32_1 = arith.constant 0 : i32
    return %2, %c0_i32 : i32, i32
  }
  func.func @transform_2(%arg0: i32, %arg1: i32) -> (i32, i32) {
    %c2_i32 = arith.constant 2 : i32
    %0 = arith.muli %arg0, %c2_i32 : i32
    %1 = arith.addi %0, %arg1 : i32
    %c2_i32_0 = arith.constant 2 : i32
    %2 = arith.minsi %1, %c2_i32_0 : i32
    %c0_i32 = arith.constant 0 : i32
    %c0_i32_1 = arith.constant 0 : i32
    return %2, %c0_i32 : i32, i32
  }
  func.func @transform_3(%arg0: i32, %arg1: i32) -> (i32, i32, i32) {
    %c0_i32 = arith.constant 0 : i32
    %c0_i32_0 = arith.constant 0 : i32
    %c0_i32_1 = arith.constant 0 : i32
    return %arg0, %c0_i32, %c0_i32_0 : i32, i32, i32
  }
}

</mosaic_0001>

<llo_original>
// kernel: tpu_custom_call.1
$region0: #{tpu_custom_call.1}
  #allocation0 [shape = 'u32[]', space=smem, size = 0x4, offset = 0x4, fixed_abs, tag = 'smem constant byte address 0x4 - core index']
  #allocation1 [shape = 'u32[72,128]{1,0:T(1,128)}', space=vmem, size = 0x9000, scoped, tag = 'internal scratch']
  %s0 = inlined_call_operand.vmem [shape: s32[20,1], index: 0, kind: input, shape index: {}]
  %s1 = inlined_call_operand.vmem [shape: f32[20,16], index: 1, kind: input, shape index: {}]
  %s2 = inlined_call_operand.vmem [shape: f32[20,16], index: 2, kind: input, shape index: {}]
  %s3 = inlined_call_operand.vmem [shape: f32[2,1,1], index: 3, kind: output, shape index: {}]
  %s4 = sld [smem:[#allocation0]]
  $region57: #{tpu_custom_call.1} parent=0
    _
  %s6 = ssub.s32 1, %s4
  %s7 = scalar_select 0, %s6, %s4
  loop: start=0, step=1, limit=6
  $region2: #{tpu_custom_call.1} parent=0 // loop_pre_header
    _
  $region3: #{tpu_custom_call.1} parent=0 // loop_header
    %s9 = sphi 0, %s13
    %p10 = scmp.ge.s32.totalorder %s9, 6
    %s16 = sphi 0, %s28
    %s17 = sphi 0, %s24
    %s18 = sphi 0, %s16
    %s19 = sphi 0, %s17
    %s20 = sphi 0, %s18
    %s21 = sphi 0, %s19
    %s39 = sphi 0, %s41
    %s42 = sphi 0, %s39
    %s43 = sphi 0, %s42
    %s59 = sphi 0, %s43
    %s73 = sphi 0, %s75
    %s76 = sphi 0, %s73
    %s77 = sphi 0, %s76
    %s93 = sphi 0, %s77
    %s107 = sphi 0, %s109
    %s110 = sphi 0, %s107
    %s111 = sphi 0, %s110
    %s127 = sphi 0, %s111
    %s133 = sphi 0, %s135
    %s136 = sphi 0, %s133
    %s137 = sphi 0, %s136
    %s153 = sphi 0, %s137
  $region4: #{tpu_custom_call.1} parent=0 // loop_header_branch
    %12 = sbr.rel (%p10) target = $region8
  $region5: #{tpu_custom_call.1} parent=0 // loop_body
    %s14 = ssub.s32 %s9, 1
    %s15 = ssub.s32 %s9, 2
    %s22 = sadd.s32 1, %s17
    %p23 = scmp.ge.s32.totalorder %s22, 2
    %s24 = scalar_select %p23, 0, %s22
    %s25 = sadd.s32 1, %s16
    %s26 = scalar_select %p23, %s25, %s16
    %p27 = scmp.ge.s32.totalorder %s26, 2
    %s28 = scalar_select %p27, 0, %s26
    %s29 = smul.u32 %s16, 2
    %s30 = sadd.s32 %s29, %s17
    %p31 = scmp.lt.s32.totalorder %s30, 2
    %s32 = scalar_select %p31, %s30, 2
    %s33 = smul.u32 %s28, 2
    %s34 = sadd.s32 %s33, %s24
    %p35 = scmp.lt.s32.totalorder %s34, 2
    %s36 = scalar_select %p35, %s34, 2
    %s37 = ssub.s32 %s32, %s36
    %p38 = scmp.eq.s32.totalorder %s37, 0
    %s40 = sadd.s32 %s39, 1
    %s41 = scalar_select %p38, %s39, %s40
    %p44 = pneg %p38
    %p45 = scmp.eq.s32.totalorder %s9, 3
    %p46 = por %p44, %p45
    %p47 = scmp.ne.s32.totalorder %s39, %s42
    %p48 = scmp.eq.s32.totalorder %s9, 0
    %p49 = por %p47, %p48
    %p50 = scmp.ne.s32.totalorder %s39, %s42
    %p51 = scmp.eq.s32.totalorder %s14, 3
    %p52 = por %p50, %p51
    %p53 = scmp.ne.s32.totalorder %s42, %s43
    %p54 = scmp.eq.s32.totalorder %s14, 0
    %p55 = por %p53, %p54
    %p56 = scmp.ne.s32.totalorder %s42, %s43
    %p57 = scmp.eq.s32.totalorder %s15, 3
    %p58 = por %p56, %p57
    %p60 = scmp.ne.s32.totalorder %s43, %s59
    %p61 = scmp.eq.s32.totalorder %s15, 0
    %p62 = por %p60, %p61
    %s63 = smul.u32 %s16, 2
    %s64 = sadd.s32 %s63, %s17
    %p65 = scmp.lt.s32.totalorder %s64, 2
    %s66 = scalar_select %p65, %s64, 2
    %s67 = smul.u32 %s28, 2
    %s68 = sadd.s32 %s67, %s24
    %p69 = scmp.lt.s32.totalorder %s68, 2
    %s70 = scalar_select %p69, %s68, 2
    %s71 = ssub.s32 %s66, %s70
    %p72 = scmp.eq.s32.totalorder %s71, 0
    %s74 = sadd.s32 %s73, 1
    %s75 = scalar_select %p72, %s73, %s74
    %p78 = pneg %p72
    %p79 = scmp.eq.s32.totalorder %s9, 3
    %p80 = por %p78, %p79
    %p81 = scmp.ne.s32.totalorder %s73, %s76
    %p82 = scmp.eq.s32.totalorder %s9, 0
    %p83 = por %p81, %p82
    %p84 = scmp.ne.s32.totalorder %s73, %s76
    %p85 = scmp.eq.s32.totalorder %s14, 3
    %p86 = por %p84, %p85
    %p87 = scmp.ne.s32.totalorder %s76, %s77
    %p88 = scmp.eq.s32.totalorder %s14, 0
    %p89 = por %p87, %p88
    %p90 = scmp.ne.s32.totalorder %s76, %s77
    %p91 = scmp.eq.s32.totalorder %s15, 3
    %p92 = por %p90, %p91
    %p94 = scmp.ne.s32.totalorder %s77, %s93
    %p95 = scmp.eq.s32.totalorder %s15, 0
    %p96 = por %p94, %p95
    %s97 = smul.u32 %s16, 2
    %s98 = sadd.s32 %s97, %s17
    %p99 = scmp.lt.s32.totalorder %s98, 2
    %s100 = scalar_select %p99, %s98, 2
    %s101 = smul.u32 %s28, 2
    %s102 = sadd.s32 %s101, %s24
    %p103 = scmp.lt.s32.totalorder %s102, 2
    %s104 = scalar_select %p103, %s102, 2
    %s105 = ssub.s32 %s100, %s104
    %p106 = scmp.eq.s32.totalorder %s105, 0
    %s108 = sadd.s32 %s107, 1
    %s109 = scalar_select %p106, %s107, %s108
    %p112 = pneg %p106
    %p113 = scmp.eq.s32.totalorder %s9, 3
    %p114 = por %p112, %p113
    %p115 = scmp.ne.s32.totalorder %s107, %s110
    %p116 = scmp.eq.s32.totalorder %s9, 0
    %p117 = por %p115, %p116
    %p118 = scmp.ne.s32.totalorder %s107, %s110
    %p119 = scmp.eq.s32.totalorder %s14, 3
    %p120 = por %p118, %p119
    %p121 = scmp.ne.s32.totalorder %s110, %s111
    %p122 = scmp.eq.s32.totalorder %s14, 0
    %p123 = por %p121, %p122
    %p124 = scmp.ne.s32.totalorder %s110, %s111
    %p125 = scmp.eq.s32.totalorder %s15, 3
    %p126 = por %p124, %p125
    %p128 = scmp.ne.s32.totalorder %s111, %s127
    %p129 = scmp.eq.s32.totalorder %s15, 0
    %p130 = por %p128, %p129
    %s131 = ssub.s32 %s16, %s28
    %p132 = scmp.eq.s32.totalorder %s131, 0
    %s134 = sadd.s32 %s133, 1
    %s135 = scalar_select %p132, %s133, %s134
    %p138 = pneg %p132
    %p139 = scmp.eq.s32.totalorder %s9, 3
    %p140 = por %p138, %p139
    %p141 = scmp.ne.s32.totalorder %s133, %s136
    %p142 = scmp.eq.s32.totalorder %s9, 0
    %p143 = por %p141, %p142
    %p144 = scmp.ne.s32.totalorder %s133, %s136
    %p145 = scmp.eq.s32.totalorder %s14, 3
    %p146 = por %p144, %p145
    %p147 = scmp.ne.s32.totalorder %s136, %s137
    %p148 = scmp.eq.s32.totalorder %s14, 0
    %p149 = por %p147, %p148
    %p150 = scmp.ne.s32.totalorder %s136, %s137
    %p151 = scmp.eq.s32.totalorder %s15, 3
    %p152 = por %p150, %p151
    %p154 = scmp.ne.s32.totalorder %s137, %s153
    %p155 = scmp.eq.s32.totalorder %s15, 0
    %p156 = por %p154, %p155
    %p157 = scmp.le.s32.totalorder 1, %s9
    %p158 = scmp.lt.s32.totalorder %s9, 5
    %p159 = pnand %p157, %p158
    %p160 = pneg %p159
    // Predicated region
    $region9: #{tpu_custom_call.1} parent=5 // pred_check
      _
    $region10: #{tpu_custom_call.1} parent=5 // pred_check_branch
      %162 = sbr.rel (%p159) target = $region12
    $region11: #{tpu_custom_call.1} parent=5 // pred_region
      %s163 = ssub.s32 %s9, 1
    $region12: #{tpu_custom_call.1} parent=5 // pred_fallthru
      _
    %p164 = scmp.lt.s32.totalorder %s9, 4
    // Predicated region
    $region13: #{tpu_custom_call.1} parent=5 // pred_check
      %p165 = pneg %p164
    $region14: #{tpu_custom_call.1} parent=5 // pred_check_branch
      %167 = sbr.rel (%p165) target = $region16
    $region15: #{tpu_custom_call.1} parent=5 // pred_region
      // Predicated region
      $region17: #{tpu_custom_call.1} parent=15 // pred_check
        %p168 = pneg %p49
      $region18: #{tpu_custom_call.1} parent=15 // pred_check_branch
        %170 = sbr.rel (%p168) target = $region20
      $region19: #{tpu_custom_call.1} parent=15 // pred_region
        %s171 = smul.u32 %s16, 2
        %s172 = sadd.s32 %s171, %s17
        %p173 = scmp.lt.s32.totalorder %s172, 2
        %s174 = scalar_select %p173, %s172, 2
        %p175 = scmp.lt.s32.totalorder %s174, 2
        %s176 = scalar_select %p175, %s174, 2
        %s177 = smul.addr %s176, 8
        %s178 = scalar_lea.vmem %s0, %s177
        %s179 = smul.u32 %s16, 2
        %s180 = sadd.s32 %s179, %s17
        %p181 = scmp.lt.s32.totalorder %s180, 2
        %s182 = scalar_select %p181, %s180, 2
      $region20: #{tpu_custom_call.1} parent=15 // pred_fallthru
        _
      // Predicated region
      $region21: #{tpu_custom_call.1} parent=15 // pred_check
        %p183 = pneg %p83
      $region22: #{tpu_custom_call.1} parent=15 // pred_check_branch
        %185 = sbr.rel (%p183) target = $region24
      $region23: #{tpu_custom_call.1} parent=15 // pred_region
        %s186 = smul.u32 %s16, 2
        %s187 = sadd.s32 %s186, %s17
        %p188 = scmp.lt.s32.totalorder %s187, 2
        %s189 = scalar_select %p188, %s187, 2
        %p190 = scmp.lt.s32.totalorder %s189, 2
        %s191 = scalar_select %p190, %s189, 2
        %s192 = smul.addr %s191, 8
        %s193 = scalar_lea.vmem %s1, %s192
        %s194 = smul.u32 %s16, 2
        %s195 = sadd.s32 %s194, %s17
        %p196 = scmp.lt.s32.totalorder %s195, 2
        %s197 = scalar_select %p196, %s195, 2
      $region24: #{tpu_custom_call.1} parent=15 // pred_fallthru
        _
      // Predicated region
      $region25: #{tpu_custom_call.1} parent=15 // pred_check
        %p198 = pneg %p117
      $region26: #{tpu_custom_call.1} parent=15 // pred_check_branch
        %200 = sbr.rel (%p198) target = $region28
      $region27: #{tpu_custom_call.1} parent=15 // pred_region
        %s201 = smul.u32 %s16, 2
        %s202 = sadd.s32 %s201, %s17
        %p203 = scmp.lt.s32.totalorder %s202, 2
        %s204 = scalar_select %p203, %s202, 2
        %p205 = scmp.lt.s32.totalorder %s204, 2
        %s206 = scalar_select %p205, %s204, 2
        %s207 = smul.addr %s206, 8
        %s208 = scalar_lea.vmem %s2, %s207
        %s209 = smul.u32 %s16, 2
        %s210 = sadd.s32 %s209, %s17
        %p211 = scmp.lt.s32.totalorder %s210, 2
        %s212 = scalar_select %p211, %s210, 2
      $region28: #{tpu_custom_call.1} parent=15 // pred_fallthru
        _
    $region16: #{tpu_custom_call.1} parent=5 // pred_fallthru
      _
    %p213 = scmp.le.s32.totalorder 1, %s9
    %p214 = scmp.lt.s32.totalorder %s9, 5
    %p215 = pnand %p213, %p214
    %p216 = pneg %p215
    // Predicated region
    $region29: #{tpu_custom_call.1} parent=5 // pred_check
      _
    $region30: #{tpu_custom_call.1} parent=5 // pred_check_branch
      %218 = sbr.rel (%p215) target = $region32
    $region31: #{tpu_custom_call.1} parent=5 // pred_region
      %s219 = ssub.s32 %s9, 1
      %s220 = smul.u32 %s18, 2
      %s221 = sadd.s32 %s220, %s19
      %p222 = scmp.lt.s32.totalorder %s221, 2
      %s223 = scalar_select %p222, %s221, 2
      %p224 = scmp.lt.s32.totalorder %s223, 2
      %s225 = scalar_select %p224, %s223, 2
      %s226 = smul.addr %s225, 8
      %s227 = scalar_lea.vmem %s0, %s226
      %p228 = pneg %p55
      %p229 = pneg %p52
      %s230 = smul.u32 %s18, 2
      %s231 = sadd.s32 %s230, %s19
      %p232 = scmp.lt.s32.totalorder %s231, 2
      %s233 = scalar_select %p232, %s231, 2
      %p234 = scmp.lt.s32.totalorder %s233, 2
      %s235 = scalar_select %p234, %s233, 2
      %s236 = smul.addr %s235, 8
      %s237 = scalar_lea.vmem %s1, %s236
      %p238 = pneg %p89
      %p239 = pneg %p86
      %s240 = smul.u32 %s18, 2
      %s241 = sadd.s32 %s240, %s19
      %p242 = scmp.lt.s32.totalorder %s241, 2
      %s243 = scalar_select %p242, %s241, 2
      %p244 = scmp.lt.s32.totalorder %s243, 2
      %s245 = scalar_select %p244, %s243, 2
      %s246 = smul.addr %s245, 8
      %s247 = scalar_lea.vmem %s2, %s246
      %p248 = pneg %p123
      %p249 = pneg %p120
      %p250 = pneg %p149
      %p251 = pneg %p146
      %p252 = scmp.lt.s32.totalorder %s18, 1
      %s253 = scalar_select %p252, %s18, 1
      %s254 = scalar_lea.vmem %s3, %s253
      %s255 = smul.u32 %s18, 2
      %s256 = sadd.s32 %s255, %s19
      %p257 = scmp.lt.s32.totalorder %s256, 2
      %s258 = scalar_select %p257, %s256, 2
      %p259 = scmp.lt.s32.totalorder %s258, 2
      %s260 = scalar_select %p259, %s258, 2
      %s261 = smul.addr %s260, 8
      %s262 = scalar_lea.vmem %s0, %s261
      %s263 = smul.u32 %s18, 2
      %s264 = sadd.s32 %s263, %s19
      %p265 = scmp.lt.s32.totalorder %s264, 2
      %s266 = scalar_select %p265, %s264, 2
      %s267 = smul.u32 %s18, 2
      %s268 = sadd.s32 %s267, %s19
      %p269 = scmp.lt.s32.totalorder %s268, 2
      %s270 = scalar_select %p269, %s268, 2
      %p271 = scmp.lt.s32.totalorder %s270, 2
      %s272 = scalar_select %p271, %s270, 2
      %s273 = smul.addr %s272, 8
      %s274 = scalar_lea.vmem %s1, %s273
      %s275 = smul.u32 %s18, 2
      %s276 = sadd.s32 %s275, %s19
      %p277 = scmp.lt.s32.totalorder %s276, 2
      %s278 = scalar_select %p277, %s276, 2
      %s279 = smul.u32 %s18, 2
      %s280 = sadd.s32 %s279, %s19
      %p281 = scmp.lt.s32.totalorder %s280, 2
      %s282 = scalar_select %p281, %s280, 2
      %p283 = scmp.lt.s32.totalorder %s282, 2
      %s284 = scalar_select %p283, %s282, 2
      %s285 = smul.addr %s284, 8
      %s286 = scalar_lea.vmem %s2, %s285
      %s287 = smul.u32 %s18, 2
      %s288 = sadd.s32 %s287, %s19
      %p289 = scmp.lt.s32.totalorder %s288, 2
      %s290 = scalar_select %p289, %s288, 2
      %p291 = scmp.lt.s32.totalorder %s18, 1
      %s292 = scalar_select %p291, %s18, 1
      %s293 = scalar_lea.vmem %s3, %s292
      %p294 = scmp.eq.s32.totalorder %s19, 0
      // Predicated region
      $region33: #{tpu_custom_call.1} parent=31 // pred_check
        %p295 = pneg %p294
      $region34: #{tpu_custom_call.1} parent=31 // pred_check_branch
        %297 = sbr.rel (%p295) target = $region36
      $region35: #{tpu_custom_call.1} parent=31 // pred_region
        %vm298 = vcmask 0
        %299 = vst.msk [vmem:[%s293] sm:$0x1] %vm298, 0.0
      $region36: #{tpu_custom_call.1} parent=31 // pred_fallthru
        _
      %v300 = vld [vmem:[%s274] sm:$0xff]
      %v301 = vld [vmem:[%s262] sm:$0xff]
      %vm302 = vcmask 130048
      %v303 = vsel %vm302, %v300, -inf
      %304 = vmax.xlane.f32.xlu0 %v303
      %v305 = vpop.xlane.xlu0 %304
      %v306 = vsub.f32 %v300, %v305
      %v307 = vmul.f32 %v306, 1.442695
      %v308 = vpow.pop %v307
      %v309 = vsel %vm302, %v308, 0.0
      %310 = vadd.xlane.f32.xlu0 %v309
      %v311 = vpop.xlane.xlu0 %310
      %v312 = vlog2.pop %v311
      %v313 = vmul.f32 %v312, 0.6931472
      %v314 = vlaneseq
      %v315 = vand.u32 %v314, 127
      %316 = vset.pattern.permute.xlu0 0
      %317 = vperm.xlu0 %316, %v301
      %v318 = vpop.permute.xlu0 %317
      %vm319 = vcmp.eq.s32.totalorder %v315, %v318
      %v320 = vsel %vm319, %v306, 0.0
      %v321 = vsel %vm302, %v320, 0.0
      %322 = vadd.xlane.f32.xlu0 %v321
      %v323 = vpop.xlane.xlu0 %322
      %vm324 = vcmp.ne.s32.totalorder %v301, 0
      %326 = vrot.lane.b32.xlu0 %v300, 127
      %v327 = vpop.permute.xlu0 %326
      %v329 = vsel %vm324, %v327, %v300
      %v330 = vld [vmem:[%s286] sm:$0xff]
      %332 = vrot.lane.b32.xlu0 %v330, 127
      %v333 = vpop.permute.xlu0 %332
      %v335 = vsel %vm324, %v333, %v330
      %v336 = vsub.f32 %v329, %v335
      %v337 = vand.u32 2147483647, %v336
      %vm338 = vcmp.lt.f32.partialorder %v337, 1.0
      %v339 = vmul.f32 %v336, 0.5
      %v340 = vmul.f32 %v339, %v336
      %v341 = vsub.f32 %v337, 0.5
      %v342 = vsel %vm338, %v340, %v341
      %v343 = vsub.f32 %v313, %v323
      %v344 = vadd.f32 %v343, %v342
      %s345 = smul.u32 %s18, 2
      %s346 = sadd.s32 %s345, %s19
      %s347 = smul.u32 %s346, 8
      %s348 = sadd.s32 %s347, 8
      %p349 = scmp.le.s32.totalorder %s348, 20
      // Predicated region
      $region37: #{tpu_custom_call.1} parent=31 // pred_check
        %p350 = pneg %p349
      $region38: #{tpu_custom_call.1} parent=31 // pred_check_branch
        %352 = sbr.rel (%p350) target = $region40
      $region39: #{tpu_custom_call.1} parent=31 // pred_region
        %v353 = vld [vmem:[%s293] sm:$0x1]
        %vm354 = vcmask 7168
        %v355 = vsel %vm354, %v344, 0.0
        %v356 = vrot.slane %v355, 4
        %v357 = vadd.f32 %v355, %v356
        %v358 = vrot.slane %v357, 2
        %v359 = vadd.f32 %v357, %v358
        %v360 = vrot.slane %v359, 1
        %v361 = vadd.f32 %v359, %v360
        %v362 = vadd.f32 %v353, %v361
        %vm363 = vcmask 0
        %364 = vst.msk [vmem:[%s293] sm:$0x1] %vm363, %v362
      $region40: #{tpu_custom_call.1} parent=31 // pred_fallthru
        _
      %p365 = scmp.gt.s32.totalorder %s348, 20
      // Predicated region
      $region41: #{tpu_custom_call.1} parent=31 // pred_check
        %p366 = pneg %p365
      $region42: #{tpu_custom_call.1} parent=31 // pred_check_branch
        %368 = sbr.rel (%p366) target = $region44
      $region43: #{tpu_custom_call.1} parent=31 // pred_region
        %v369 = vlaneseq
        %v370 = vshrl.u32 %v369, 7
        %v371 = vstv %s347
        %v372 = vadd.s32 %v370, %v371
        %vm373 = vcmp.lt.s32.totalorder %v372, 20
        %v374 = vsel %vm373, %v344, 0.0
        %v375 = vld [vmem:[%s293] sm:$0x1]
        %vm376 = vcmask 7168
        %v377 = vsel %vm376, %v374, 0.0
        %v378 = vrot.slane %v377, 4
        %v379 = vadd.f32 %v377, %v378
        %v380 = vrot.slane %v379, 2
        %v381 = vadd.f32 %v379, %v380
        %v382 = vrot.slane %v381, 1
        %v383 = vadd.f32 %v381, %v382
        %v384 = vadd.f32 %v375, %v383
        %vm385 = vcmask 0
        %386 = vst.msk [vmem:[%s293] sm:$0x1] %vm385, %v384
      $region44: #{tpu_custom_call.1} parent=31 // pred_fallthru
        _
      %p387 = scmp.lt.s32.totalorder %s18, 1
      %s388 = scalar_select %p387, %s18, 1
      %s389 = scalar_lea.vmem %s3, %s388
      // Predicated region
      $region45: #{tpu_custom_call.1} parent=31 // pred_check
        %p390 = pneg %p146
      $region46: #{tpu_custom_call.1} parent=31 // pred_check_branch
        %392 = sbr.rel (%p390) target = $region48
      $region47: #{tpu_custom_call.1} parent=31 // pred_region
        _
      $region48: #{tpu_custom_call.1} parent=31 // pred_fallthru
        _
    $region32: #{tpu_custom_call.1} parent=5 // pred_fallthru
      _
    %p393 = scmp.le.s32.totalorder 2, %s9
    // Predicated region
    $region49: #{tpu_custom_call.1} parent=5 // pred_check
      %p394 = pneg %p393
    $region50: #{tpu_custom_call.1} parent=5 // pred_check_branch
      %396 = sbr.rel (%p394) target = $region52
    $region51: #{tpu_custom_call.1} parent=5 // pred_region
      %s397 = ssub.s32 %s9, 2
      // Predicated region
      $region53: #{tpu_custom_call.1} parent=51 // pred_check
        %p398 = pneg %p152
      $region54: #{tpu_custom_call.1} parent=51 // pred_check_branch
        %400 = sbr.rel (%p398) target = $region56
      $region55: #{tpu_custom_call.1} parent=51 // pred_region
        %p401 = scmp.lt.s32.totalorder %s20, 1
        %s402 = scalar_select %p401, %s20, 1
        %s403 = scalar_lea.vmem %s3, %s402
      $region56: #{tpu_custom_call.1} parent=51 // pred_fallthru
        _
    $region52: #{tpu_custom_call.1} parent=5 // pred_fallthru
      _
  $region6: #{tpu_custom_call.1} parent=0 // loop_footer
    %s13 = sadd.s32 1, %s9
  $region7: #{tpu_custom_call.1} parent=0 // loop_footer_branch
    %8 = sbr.rel target = $region3
  $region8: #{tpu_custom_call.1} parent=0 // loop_exit
    _

</llo_original>
